<compile_context>
chip_gen: v7x
topology: tpu7x:2x2x1
jax: 0.10.0
libtpu: 0.0.40
codegen_flags: <defaults>
</compile_context>

<pallas_src>
import functools

import jax
import jax.numpy as jnp
from jax.experimental import pallas as pl
from jax.experimental.pallas import tpu as pltpu


def _round_up(v, m):
    return ((v + m - 1) // m) * m


def _pwff_kernel(x_ref, w1_ref, b1_ref, w2_ref, b2_ref, o_ref):
    # x_ref: (tile_n, H) activations; w1: (H, Hp) bf16; w2: (Hp, Hp) bf16;
    # b1/b2: (1, Hp) f32; o_ref: (tile_n, Hp).
    xb = x_ref[...].astype(jnp.bfloat16)
    # conv1 (1x1) == matmul over hidden dim (bf16 MXU, f32 accumulate) + bias + ReLU.
    h = jnp.dot(xb, w1_ref[...], preferred_element_type=jnp.float32) + b1_ref[...]
    h = jnp.maximum(h, 0.0)
    # conv2 (1x1) == matmul over hidden dim + bias.
    y = (jnp.dot(h.astype(jnp.bfloat16), w2_ref[...],
                 preferred_element_type=jnp.float32) + b2_ref[...])
    # Residual: re-read x from VMEM (cheap) instead of keeping it live across
    # both matmuls; pad it to the lane-dense Hp width in-register.
    x = x_ref[...].astype(jnp.float32)
    h_in = x.shape[-1]
    hp = y.shape[-1]
    if hp != h_in:
        x = jnp.concatenate(
            [x, jnp.zeros((x.shape[0], hp - h_in), jnp.float32)], axis=-1)
    o_ref[...] = (y + x).astype(o_ref.dtype)


def _const_block_spec(block_shape, index_map):
    """BlockSpec for grid-invariant operands: single-buffered if supported."""
    buffered = getattr(pl, "Buffered", None)
    if buffered is not None:
        try:
            return pl.BlockSpec(block_shape, index_map, pipeline_mode=buffered(1))
        except TypeError:
            pass
    return pl.BlockSpec(block_shape, index_map)


def _vmem_budget_bytes():
    # Generation-aware: v5e/v6e report 128 MiB, v7x 64 MiB per TensorCore.
    cap = 64 * 1024 * 1024  # safe floor (v7x) if the query is unavailable
    try:
        info = pltpu.get_tpu_info()
        cap = int(getattr(info, "vmem_capacity_bytes", cap))
    except Exception:
        pass
    return max(32 * 1024 * 1024, cap - 16 * 1024 * 1024)


def _vmem_needed(tile_n, h, hp, act_bytes):
    return (2 * tile_n * h * act_bytes          # x tiles, double-buffered
            + 2 * tile_n * hp * act_bytes       # out tiles, double-buffered
            + (h * hp + hp * hp) * 2            # bf16 weights, single-buffered
            + 2 * hp * 4                        # biases
            + 3 * tile_n * hp * 4)              # in-kernel temporaries / slack


@functools.partial(jax.jit, static_argnames=("tile_n",))
def pointwise_feed_forward(x, w1, b1, w2, b2, *, tile_n=None):
    """x: (B, L, H).  w1, w2: (H, H), pre-transposed so out = x @ w (pre-cast to
    bf16 at parameter load is recommended).  b1, b2: (H,).  Returns (B, L, H)
    in x.dtype (pass bf16 x for a bf16 activation-I/O path)."""
    B, L, H = x.shape
    N = B * L
    Hp = _round_up(H, 128)                       # lane-dense hidden dim
    act_bytes = jnp.dtype(x.dtype).itemsize
    budget = _vmem_budget_bytes()

    # Token tile: large (amortizes ~0.35 us/grid-step, taller MXU LHS, ~85%+ of
    # HBM roofline at >=512 rows), multiple of 8, but keep >=2 grid steps so
    # both v7x TensorCores get work, and stay inside the VMEM budget.
    if tile_n is None:
        tile_n = min(1024, _round_up(N, 8))
        if N > 8:
            tile_n = min(tile_n, max(8, _round_up((N + 1) // 2, 8)))
        while tile_n > 8 and _vmem_needed(tile_n, H, Hp, act_bytes) > budget:
            tile_n = max(8, _round_up(tile_n // 2, 8))
    assert tile_n % 8 == 0, "tile_n must be a multiple of 8"
    # TODO(synk): for very large H where both resident bf16 weights no longer fit
    # the v7x 64 MiB VMEM, switch to a K-tiled ('arbitrary') grid axis with an
    # f32 VMEM accumulator instead of keeping full weights resident.

    x2d = x.reshape(N, H)                        # no HBM padding of activations
    if Hp != H:
        pad = Hp - H
        w1 = jnp.pad(w1, ((0, 0), (0, pad)))     # (H, Hp)
        w2 = jnp.pad(w2, ((0, pad), (0, pad)))   # (Hp, Hp)
        b1 = jnp.pad(b1, ((0, pad),))
        b2 = jnp.pad(b2, ((0, pad),))
    w1b = w1.astype(jnp.bfloat16)                # no-op if pre-cast by caller
    w2b = w2.astype(jnp.bfloat16)
    b1_2d = b1.reshape(1, Hp).astype(jnp.float32)
    b2_2d = b2.reshape(1, Hp).astype(jnp.float32)

    grid = (pl.cdiv(N, tile_n),)
    vmem_limit = int(min(budget,
                         max(32 * 1024 * 1024,
                             _vmem_needed(tile_n, H, Hp, act_bytes) + (8 << 20))))

    cost = pl.CostEstimate(
        flops=2 * N * H * Hp + 2 * N * Hp * Hp,
        transcendentals=0,
        bytes_accessed=(N * H * act_bytes + N * Hp * act_bytes
                        + (H * Hp + Hp * Hp) * 2 + 2 * Hp * 4),
    )

    out2d = pl.pallas_call(
        _pwff_kernel,
        out_shape=jax.ShapeDtypeStruct((N, Hp), x.dtype),
        grid_spec=pl.GridSpec(
            grid=grid,
            in_specs=[
                pl.BlockSpec((tile_n, H), lambda i: (i, 0)),    # x tile (unpadded H)
                _const_block_spec((H, Hp), lambda i: (0, 0)),   # W1 bf16, single-buffered
                _const_block_spec((1, Hp), lambda i: (0, 0)),   # b1
                _const_block_spec((Hp, Hp), lambda i: (0, 0)),  # W2 bf16, single-buffered
                _const_block_spec((1, Hp), lambda i: (0, 0)),   # b2
            ],
            out_specs=pl.BlockSpec((tile_n, Hp), lambda i: (i, 0)),
        ),
        compiler_params=pltpu.CompilerParams(
            dimension_semantics=("parallel",),
            vmem_limit_bytes=vmem_limit,
        ),
        cost_estimate=cost,
    )(x2d, w1b, b1_2d, w2b, b2_2d)

    # Drop hidden-dim padding (single pass) and restore (B, L, H).
    if Hp != H:
        out2d = out2d[:, :H]
    return out2d.reshape(B, L, H)


def _reference(x, w1, b1, w2, b2):
    h = jnp.maximum(jnp.einsum("blh,hk->blk", x, w1) + b1, 0.0)
    y = jnp.einsum("blh,hk->blk", h, w2) + b2
    return y + x


if __name__ == "__main__":
    B, L, H = 2, 8, 32  # batch, seq_len, hidden_units
    key = jax.random.PRNGKey(0)
    kx, k1, k2, k3, k4 = jax.random.split(key, 5)

    x = jax.random.normal(kx, (B, L, H), dtype=jnp.float32)

    # Deterministic parameter init (conv1d kernel_size=1 weights, pre-transposed
    # so that out = x @ W + b matches torch's conv over the channel dim).
    scale = 1.0 / jnp.sqrt(H)
    w1 = jax.random.uniform(k1, (H, H), jnp.float32, -scale, scale)
    b1 = jax.random.uniform(k2, (H,), jnp.float32, -scale, scale)
    w2 = jax.random.uniform(k3, (H, H), jnp.float32, -scale, scale)
    b2 = jax.random.uniform(k4, (H,), jnp.float32, -scale, scale)

    # Pre-cast weights to bf16 once at "parameter load" (hoisted out of the call).
    w1b = jax.device_put(w1.astype(jnp.bfloat16))
    w2b = jax.device_put(w2.astype(jnp.bfloat16))

    out = pointwise_feed_forward(x, w1b, b1, w2b, b2)
    out = jax.block_until_ready(out)

    ref = _reference(x, w1, b1, w2, b2)
    assert out.shape == (B, L, H)
    # bf16 MXU operands (f32 accumulate/bias/residual) -> loosened tolerance.
    assert jnp.allclose(out, ref, atol=3e-2, rtol=3e-2), "mismatch vs reference"

    # TODO(synk): dropout (p=0.0) is identity at inference; training-mode dropout omitted.
    print("KERNEL_OK")
</pallas_src>

<mosaic_0001>
module attributes {stable_mosaic.version = 11 : i64} {
  func.func @_pwff_kernel(%arg0: i32, %arg1: memref<8x32xf32, #tpu.memory_space<vmem>>, %arg2: memref<32x128xbf16, #tpu.memory_space<vmem>>, %arg3: memref<1x128xf32, #tpu.memory_space<vmem>>, %arg4: memref<128x128xbf16, #tpu.memory_space<vmem>>, %arg5: memref<1x128xf32, #tpu.memory_space<vmem>>, %arg6: memref<8x128xf32, #tpu.memory_space<vmem>>) attributes {dimension_semantics = [#tpu.dimension_semantics<parallel>], iteration_bounds = array<i64: 2>, scalar_prefetch = 0 : i64, scratch_operands = 0 : i64, tpu.core_type = #tpu.core_type<tc>, window_params = [{transform_indices = @transform_0, window_bounds = array<i64: 8, 32>}, {pipeline_mode = #tpu.pipeline_mode<synchronous>, transform_indices = @transform_1, window_bounds = array<i64: 32, 128>}, {pipeline_mode = #tpu.pipeline_mode<synchronous>, transform_indices = @transform_2, window_bounds = array<i64: 1, 128>}, {pipeline_mode = #tpu.pipeline_mode<synchronous>, transform_indices = @transform_3, window_bounds = array<i64: 128, 128>}, {pipeline_mode = #tpu.pipeline_mode<synchronous>, transform_indices = @transform_4, window_bounds = array<i64: 1, 128>}, {transform_indices = @transform_5, window_bounds = array<i64: 8, 128>}]} {
    %c0 = arith.constant 0 : index
    %c0_0 = arith.constant 0 : index
    %0 = vector.load %arg1[%c0, %c0_0] : memref<8x32xf32, #tpu.memory_space<vmem>>, vector<8x32xf32>
    %1 = arith.truncf %0 : vector<8x32xf32> to vector<8x32xbf16>
    %c0_1 = arith.constant 0 : index
    %c0_2 = arith.constant 0 : index
    %2 = vector.load %arg2[%c0_1, %c0_2] : memref<32x128xbf16, #tpu.memory_space<vmem>>, vector<32x128xbf16>
    %cst = arith.constant dense<0.000000e+00> : vector<8x128xf32>
    %3 = tpu.matmul %1, %2, %cst {dimension_numbers = #tpu.dot_dimension_numbers<[1], [0], [0], [1], [0, 0, 1, 1], [], []>} : vector<8x32xbf16>, vector<32x128xbf16>, vector<8x128xf32> -> vector<8x128xf32>
    %c0_3 = arith.constant 0 : index
    %c0_4 = arith.constant 0 : index
    %4 = vector.load %arg3[%c0_3, %c0_4] : memref<1x128xf32, #tpu.memory_space<vmem>>, vector<1x128xf32>
    %5 = vector.broadcast %4 : vector<1x128xf32> to vector<8x128xf32>
    %6 = arith.addf %3, %5 : vector<8x128xf32>
    %cst_5 = arith.constant 0.000000e+00 : f32
    %7 = vector.broadcast %cst_5 : f32 to vector<8x128xf32>
    %8 = arith.maximumf %6, %7 : vector<8x128xf32>
    %9 = arith.truncf %8 : vector<8x128xf32> to vector<8x128xbf16>
    %c0_6 = arith.constant 0 : index
    %c0_7 = arith.constant 0 : index
    %10 = vector.load %arg4[%c0_6, %c0_7] : memref<128x128xbf16, #tpu.memory_space<vmem>>, vector<128x128xbf16>
    %cst_8 = arith.constant dense<0.000000e+00> : vector<8x128xf32>
    %11 = tpu.matmul %9, %10, %cst_8 {dimension_numbers = #tpu.dot_dimension_numbers<[1], [0], [0], [1], [0, 0, 1, 1], [], []>} : vector<8x128xbf16>, vector<128x128xbf16>, vector<8x128xf32> -> vector<8x128xf32>
    %c0_9 = arith.constant 0 : index
    %c0_10 = arith.constant 0 : index
    %12 = vector.load %arg5[%c0_9, %c0_10] : memref<1x128xf32, #tpu.memory_space<vmem>>, vector<1x128xf32>
    %13 = vector.broadcast %12 : vector<1x128xf32> to vector<8x128xf32>
    %14 = arith.addf %11, %13 : vector<8x128xf32>
    %c0_11 = arith.constant 0 : index
    %c0_12 = arith.constant 0 : index
    %15 = vector.load %arg1[%c0_11, %c0_12] : memref<8x32xf32, #tpu.memory_space<vmem>>, vector<8x32xf32>
    %cst_13 = arith.constant 0.000000e+00 : f32
    %16 = vector.broadcast %cst_13 : f32 to vector<8x96xf32>
    %17 = tpu.concatenate %15, %16 in 1 : vector<8x32xf32>, vector<8x96xf32> -> vector<8x128xf32>
    %18 = arith.addf %14, %17 : vector<8x128xf32>
    %c0_14 = arith.constant 0 : index
    %c0_15 = arith.constant 0 : index
    %19 = vector.load %arg6[%c0_14, %c0_15] : memref<8x128xf32, #tpu.memory_space<vmem>>, vector<8x128xf32>
    tpu.vector_store %arg6[%c0_14, %c0_15], %18 {strides = array<i32>} : memref<8x128xf32, #tpu.memory_space<vmem>>, vector<8x128xf32>,
    return
  }
  func.func @transform_0(%arg0: i32) -> (i32, i32) {
    %c0_i32 = arith.constant 0 : i32
    %c0_i32_0 = arith.constant 0 : i32
    return %arg0, %c0_i32 : i32, i32
  }
  func.func @transform_1(%arg0: i32) -> (i32, i32) {
    %c0_i32 = arith.constant 0 : i32
    %c0_i32_0 = arith.constant 0 : i32
    %c0_i32_1 = arith.constant 0 : i32
    return %c0_i32, %c0_i32_0 : i32, i32
  }
  func.func @transform_2(%arg0: i32) -> (i32, i32) {
    %c0_i32 = arith.constant 0 : i32
    %c0_i32_0 = arith.constant 0 : i32
    %c0_i32_1 = arith.constant 0 : i32
    return %c0_i32, %c0_i32_0 : i32, i32
  }
  func.func @transform_3(%arg0: i32) -> (i32, i32) {
    %c0_i32 = arith.constant 0 : i32
    %c0_i32_0 = arith.constant 0 : i32
    %c0_i32_1 = arith.constant 0 : i32
    return %c0_i32, %c0_i32_0 : i32, i32
  }
  func.func @transform_4(%arg0: i32) -> (i32, i32) {
    %c0_i32 = arith.constant 0 : i32
    %c0_i32_0 = arith.constant 0 : i32
    %c0_i32_1 = arith.constant 0 : i32
    return %c0_i32, %c0_i32_0 : i32, i32
  }
  func.func @transform_5(%arg0: i32) -> (i32, i32) {
    %c0_i32 = arith.constant 0 : i32
    %c0_i32_0 = arith.constant 0 : i32
    return %arg0, %c0_i32 : i32, i32
  }
}

</mosaic_0001>

<llo_original>
// kernel: pointwise_feed_forward.1
$region0: #{pointwise_feed_forward.1}
  #allocation0 [shape = 'u32[]', space=smem, size = 0x4, offset = 0x4, fixed_abs, tag = 'smem constant byte address 0x4 - core index']
  #allocation1 [shape = 'u32[144,128]{1,0:T(1,128)}', space=vmem, size = 0x12000, scoped, tag = 'internal scratch']
  %s0 = inlined_call_operand.vmem [shape: f32[16,32], index: 0, kind: input, shape index: {}]
  %s1 = inlined_call_operand.vmem [shape: bf16[32,128], index: 1, kind: input, shape index: {}]
  %s2 = inlined_call_operand.vmem [shape: f32[1,128], index: 2, kind: input, shape index: {}]
  %s3 = inlined_call_operand.vmem [shape: bf16[128,128], index: 3, kind: input, shape index: {}]
  %s4 = inlined_call_operand.vmem [shape: f32[1,128], index: 4, kind: input, shape index: {}]
  %s5 = inlined_call_operand.vmem [shape: f32[16,128], index: 5, kind: output, shape index: {}]
  %s6 = sld [smem:[#allocation0]]
  $region53: #{pointwise_feed_forward.1} parent=0
    _
  %s8 = ssub.s32 1, %s6
  %s9 = scalar_select 0, %s8, %s6
  loop: start=0, step=1, limit=4
  $region2: #{pointwise_feed_forward.1} parent=0 // loop_pre_header
    _
  $region3: #{pointwise_feed_forward.1} parent=0 // loop_header
    %s11 = sphi 0, %s15
    %p12 = scmp.ge.s32.totalorder %s11, 4
    %s21 = sphi 0, %s23
    %s24 = sphi 0, %s21
    %s25 = sphi 0, %s24
    %s41 = sphi 0, %s25
    %s45 = sphi 0, %s45
    %s47 = sphi 0, %s45
    %s48 = sphi 0, %s47
    %s62 = sphi 0, %s48
    %s66 = sphi 0, %s66
    %s68 = sphi 0, %s66
    %s69 = sphi 0, %s68
    %s83 = sphi 0, %s69
    %s87 = sphi 0, %s87
    %s89 = sphi 0, %s87
    %s90 = sphi 0, %s89
    %s104 = sphi 0, %s90
    %s108 = sphi 0, %s108
    %s110 = sphi 0, %s108
    %s111 = sphi 0, %s110
    %s125 = sphi 0, %s111
    %s131 = sphi 0, %s133
    %s134 = sphi 0, %s131
    %s135 = sphi 0, %s134
    %s151 = sphi 0, %s135
  $region4: #{pointwise_feed_forward.1} parent=0 // loop_header_branch
    %14 = sbr.rel (%p12) target = $region8
  $region5: #{pointwise_feed_forward.1} parent=0 // loop_body
    %s16 = ssub.s32 %s11, 1
    %s17 = ssub.s32 %s11, 2
    %s18 = sadd.s32 %s11, 1
    %s19 = ssub.s32 %s11, %s18
    %p20 = scmp.eq.s32.totalorder %s19, 0
    %s22 = sadd.s32 %s21, 1
    %s23 = scalar_select %p20, %s21, %s22
    %p26 = pneg %p20
    %p27 = scmp.eq.s32.totalorder %s11, 1
    %p28 = por %p26, %p27
    %p29 = scmp.ne.s32.totalorder %s21, %s24
    %p30 = scmp.eq.s32.totalorder %s11, 0
    %p31 = por %p29, %p30
    %p32 = scmp.ne.s32.totalorder %s21, %s24
    %p33 = scmp.eq.s32.totalorder %s16, 1
    %p34 = por %p32, %p33
    %p35 = scmp.ne.s32.totalorder %s24, %s25
    %p36 = scmp.eq.s32.totalorder %s16, 0
    %p37 = por %p35, %p36
    %p38 = scmp.ne.s32.totalorder %s24, %s25
    %p39 = scmp.eq.s32.totalorder %s17, 1
    %p40 = por %p38, %p39
    %p42 = scmp.ne.s32.totalorder %s25, %s41
    %p43 = scmp.eq.s32.totalorder %s17, 0
    %p44 = por %p42, %p43
    %s46 = sadd.s32 %s45, 1
    %p49 = scmp.eq.s32.totalorder %s11, 1
    %p50 = scmp.ne.s32.totalorder %s45, %s47
    %p51 = scmp.eq.s32.totalorder %s11, 0
    %p52 = por %p50, %p51
    %p53 = scmp.ne.s32.totalorder %s45, %s47
    %p54 = scmp.eq.s32.totalorder %s16, 1
    %p55 = por %p53, %p54
    %p56 = scmp.ne.s32.totalorder %s47, %s48
    %p57 = scmp.eq.s32.totalorder %s16, 0
    %p58 = por %p56, %p57
    %p59 = scmp.ne.s32.totalorder %s47, %s48
    %p60 = scmp.eq.s32.totalorder %s17, 1
    %p61 = por %p59, %p60
    %p63 = scmp.ne.s32.totalorder %s48, %s62
    %p64 = scmp.eq.s32.totalorder %s17, 0
    %p65 = por %p63, %p64
    %s67 = sadd.s32 %s66, 1
    %p70 = scmp.eq.s32.totalorder %s11, 1
    %p71 = scmp.ne.s32.totalorder %s66, %s68
    %p72 = scmp.eq.s32.totalorder %s11, 0
    %p73 = por %p71, %p72
    %p74 = scmp.ne.s32.totalorder %s66, %s68
    %p75 = scmp.eq.s32.totalorder %s16, 1
    %p76 = por %p74, %p75
    %p77 = scmp.ne.s32.totalorder %s68, %s69
    %p78 = scmp.eq.s32.totalorder %s16, 0
    %p79 = por %p77, %p78
    %p80 = scmp.ne.s32.totalorder %s68, %s69
    %p81 = scmp.eq.s32.totalorder %s17, 1
    %p82 = por %p80, %p81
    %p84 = scmp.ne.s32.totalorder %s69, %s83
    %p85 = scmp.eq.s32.totalorder %s17, 0
    %p86 = por %p84, %p85
    %s88 = sadd.s32 %s87, 1
    %p91 = scmp.eq.s32.totalorder %s11, 1
    %p92 = scmp.ne.s32.totalorder %s87, %s89
    %p93 = scmp.eq.s32.totalorder %s11, 0
    %p94 = por %p92, %p93
    %p95 = scmp.ne.s32.totalorder %s87, %s89
    %p96 = scmp.eq.s32.totalorder %s16, 1
    %p97 = por %p95, %p96
    %p98 = scmp.ne.s32.totalorder %s89, %s90
    %p99 = scmp.eq.s32.totalorder %s16, 0
    %p100 = por %p98, %p99
    %p101 = scmp.ne.s32.totalorder %s89, %s90
    %p102 = scmp.eq.s32.totalorder %s17, 1
    %p103 = por %p101, %p102
    %p105 = scmp.ne.s32.totalorder %s90, %s104
    %p106 = scmp.eq.s32.totalorder %s17, 0
    %p107 = por %p105, %p106
    %s109 = sadd.s32 %s108, 1
    %p112 = scmp.eq.s32.totalorder %s11, 1
    %p113 = scmp.ne.s32.totalorder %s108, %s110
    %p114 = scmp.eq.s32.totalorder %s11, 0
    %p115 = por %p113, %p114
    %p116 = scmp.ne.s32.totalorder %s108, %s110
    %p117 = scmp.eq.s32.totalorder %s16, 1
    %p118 = por %p116, %p117
    %p119 = scmp.ne.s32.totalorder %s110, %s111
    %p120 = scmp.eq.s32.totalorder %s16, 0
    %p121 = por %p119, %p120
    %p122 = scmp.ne.s32.totalorder %s110, %s111
    %p123 = scmp.eq.s32.totalorder %s17, 1
    %p124 = por %p122, %p123
    %p126 = scmp.ne.s32.totalorder %s111, %s125
    %p127 = scmp.eq.s32.totalorder %s17, 0
    %p128 = por %p126, %p127
    %s129 = ssub.s32 %s11, %s18
    %p130 = scmp.eq.s32.totalorder %s129, 0
    %s132 = sadd.s32 %s131, 1
    %s133 = scalar_select %p130, %s131, %s132
    %p136 = pneg %p130
    %p137 = scmp.eq.s32.totalorder %s11, 1
    %p138 = por %p136, %p137
    %p139 = scmp.ne.s32.totalorder %s131, %s134
    %p140 = scmp.eq.s32.totalorder %s11, 0
    %p141 = por %p139, %p140
    %p142 = scmp.ne.s32.totalorder %s131, %s134
    %p143 = scmp.eq.s32.totalorder %s16, 1
    %p144 = por %p142, %p143
    %p145 = scmp.ne.s32.totalorder %s134, %s135
    %p146 = scmp.eq.s32.totalorder %s16, 0
    %p147 = por %p145, %p146
    %p148 = scmp.ne.s32.totalorder %s134, %s135
    %p149 = scmp.eq.s32.totalorder %s17, 1
    %p150 = por %p148, %p149
    %p152 = scmp.ne.s32.totalorder %s135, %s151
    %p153 = scmp.eq.s32.totalorder %s17, 0
    %p154 = por %p152, %p153
    %p155 = scmp.le.s32.totalorder 1, %s11
    %p156 = scmp.lt.s32.totalorder %s11, 3
    %p157 = pnand %p155, %p156
    %p158 = pneg %p157
    // Predicated region
    $region9: #{pointwise_feed_forward.1} parent=5 // pred_check
      _
    $region10: #{pointwise_feed_forward.1} parent=5 // pred_check_branch
      %160 = sbr.rel (%p157) target = $region12
    $region11: #{pointwise_feed_forward.1} parent=5 // pred_region
      %s161 = ssub.s32 %s11, 1
      // Predicated region
      $region13: #{pointwise_feed_forward.1} parent=11 // pred_check
        %p162 = pneg %p58
      $region14: #{pointwise_feed_forward.1} parent=11 // pred_check_branch
        %164 = sbr.rel (%p162) target = $region16
      $region15: #{pointwise_feed_forward.1} parent=11 // pred_region
        _
      $region16: #{pointwise_feed_forward.1} parent=11 // pred_fallthru
        _
      // Predicated region
      $region17: #{pointwise_feed_forward.1} parent=11 // pred_check
        %p165 = pneg %p79
      $region18: #{pointwise_feed_forward.1} parent=11 // pred_check_branch
        %167 = sbr.rel (%p165) target = $region20
      $region19: #{pointwise_feed_forward.1} parent=11 // pred_region
        _
      $region20: #{pointwise_feed_forward.1} parent=11 // pred_fallthru
        _
      // Predicated region
      $region21: #{pointwise_feed_forward.1} parent=11 // pred_check
        %p168 = pneg %p100
      $region22: #{pointwise_feed_forward.1} parent=11 // pred_check_branch
        %170 = sbr.rel (%p168) target = $region24
      $region23: #{pointwise_feed_forward.1} parent=11 // pred_region
        _
      $region24: #{pointwise_feed_forward.1} parent=11 // pred_fallthru
        _
      // Predicated region
      $region25: #{pointwise_feed_forward.1} parent=11 // pred_check
        %p171 = pneg %p121
      $region26: #{pointwise_feed_forward.1} parent=11 // pred_check_branch
        %173 = sbr.rel (%p171) target = $region28
      $region27: #{pointwise_feed_forward.1} parent=11 // pred_region
        _
      $region28: #{pointwise_feed_forward.1} parent=11 // pred_fallthru
        _
    $region12: #{pointwise_feed_forward.1} parent=5 // pred_fallthru
      _
    %p174 = scmp.lt.s32.totalorder %s11, 2
    // Predicated region
    $region29: #{pointwise_feed_forward.1} parent=5 // pred_check
      %p175 = pneg %p174
    $region30: #{pointwise_feed_forward.1} parent=5 // pred_check_branch
      %177 = sbr.rel (%p175) target = $region32
    $region31: #{pointwise_feed_forward.1} parent=5 // pred_region
      // Predicated region
      $region33: #{pointwise_feed_forward.1} parent=31 // pred_check
        %p178 = pneg %p31
      $region34: #{pointwise_feed_forward.1} parent=31 // pred_check_branch
        %180 = sbr.rel (%p178) target = $region36
      $region35: #{pointwise_feed_forward.1} parent=31 // pred_region
        %p181 = scmp.lt.s32.totalorder %s11, 1
        %s182 = scalar_select %p181, %s11, 1
        %s183 = smul.addr %s182, 8
        %s184 = scalar_lea.vmem %s0, %s183
      $region36: #{pointwise_feed_forward.1} parent=31 // pred_fallthru
        _
    $region32: #{pointwise_feed_forward.1} parent=5 // pred_fallthru
      _
    %p185 = scmp.le.s32.totalorder 1, %s11
    %p186 = scmp.lt.s32.totalorder %s11, 3
    %p187 = pnand %p185, %p186
    %p188 = pneg %p187
    // Predicated region
    $region37: #{pointwise_feed_forward.1} parent=5 // pred_check
      _
    $region38: #{pointwise_feed_forward.1} parent=5 // pred_check_branch
      %190 = sbr.rel (%p187) target = $region40
    $region39: #{pointwise_feed_forward.1} parent=5 // pred_region
      %s191 = ssub.s32 %s11, 1
      %p192 = scmp.lt.s32.totalorder %s16, 1
      %s193 = scalar_select %p192, %s16, 1
      %s194 = smul.addr %s193, 8
      %s195 = scalar_lea.vmem %s0, %s194
      %p196 = pneg %p37
      %p197 = pneg %p34
      %p198 = pneg %p58
      %p199 = pneg %p55
      %p200 = pneg %p79
      %p201 = pneg %p76
      %p202 = pneg %p100
      %p203 = pneg %p97
      %p204 = pneg %p121
      %p205 = pneg %p118
      %p206 = pneg %p147
      %p207 = pneg %p144
      %p208 = scmp.lt.s32.totalorder %s16, 1
      %s209 = scalar_select %p208, %s16, 1
      %s210 = smul.addr %s209, 8
      %s211 = scalar_lea.vmem %s5, %s210
      %p212 = scmp.lt.s32.totalorder %s16, 1
      %s213 = scalar_select %p212, %s16, 1
      %s214 = smul.addr %s213, 8
      %s215 = scalar_lea.vmem %s0, %s214
      %p216 = scmp.lt.s32.totalorder %s16, 1
      %s217 = scalar_select %p216, %s16, 1
      %s218 = smul.addr %s217, 8
      %s219 = scalar_lea.vmem %s5, %s218
      %v221 = vld [vmem:[%s215] sm:$0xff]
      %v222 = vpack.c.bf16 %v221, %v221
      %v223 = vld [vmem:[%s1] sm:$0xf]
      %v224 = vld [vmem:[%s1 + $0x4] sm:$0xf]
      %v225 = vld [vmem:[%s1 + $0x8] sm:$0xf]
      %v226 = vld [vmem:[%s1 + $0xc] sm:$0xf]
      %v227 = vld [vmem:[%s2] sm:$0x1]
      %v229 = vlaneseq
      %v230 = vshrl.u32 %v229, 7
      %v231 = vsub.s32 0, %v230
      %v232 = vrot.slane %v227, %v231
      %v238 = vunpack.c.l.b16 %v223
      %v239 = vunpack.c.l.b16 %v224
      %v240 = vunpack.c.l.b16 %v225
      %v241 = vunpack.c.l.b16 %v226
      %v242 = vpack.c.b16 %v239, %v238
      %v243 = vpack.c.b16 %v241, %v240
      %vm246 = vcmask 261120
      %v248 = vsel %vm246, %v222, 0
      %250 = vmatprep.subr.bf16.mxu0 0
      %251 = vmatpush1.bf16.msra.mxu0 %v242
      %252 = vmatprep.subr.bf16.mxu0 0
      %253 = vmatpush1.bf16.msra.mxu0 %v243
      %254 = vmatprep.subr.bf16.mxu0 0
      %255 = vmatpush1.bf16.msra.mxu0 0
      %256 = vmatprep.subr.bf16.mxu0 0
      %257 = vmatpush1.bf16.msra.mxu0 0
      %258 = vmatprep.subr.bf16.mxu0 0
      %259 = vmatpush1.bf16.msra.mxu0 0
      %260 = vmatprep.subr.bf16.mxu0 0
      %261 = vmatpush1.bf16.msra.mxu0 0
      %262 = vmatprep.subr.bf16.mxu0 0
      %263 = vmatpush1.bf16.msra.mxu0 0
      %264 = vmatprep.subr.bf16.mxu0 0
      %265 = vmatpush1.bf16.msra.mxu0 0
      %266 = vmatprep.subr.bf16.mxu0 0
      %267 = vmatpush1.bf16.msra.mxu0 0
      %268 = vmatprep.subr.bf16.mxu0 0
      %269 = vmatpush1.bf16.msra.mxu0 0
      %270 = vmatprep.subr.bf16.mxu0 0
      %271 = vmatpush1.bf16.msra.mxu0 0
      %272 = vmatprep.subr.bf16.mxu0 0
      %273 = vmatpush1.bf16.msra.mxu0 0
      %274 = vmatprep.subr.bf16.mxu0 0
      %275 = vmatpush1.bf16.msra.mxu0 0
      %276 = vmatprep.subr.bf16.mxu0 0
      %277 = vmatpush1.bf16.msra.mxu0 0
      %278 = vmatprep.subr.bf16.mxu0 0
      %279 = vmatpush1.bf16.msra.mxu0 0
      %280 = vmatprep.subr.bf16.mxu0 0
      %281 = vmatpush1.bf16.msra.mxu0 0
      %282 = vmatprep.mubr.bf16.mxu0 0
      %283 = vmatmul.mubr.bf16.gmra.mrb[0].mxu0 %v248
      %v284 = vpop.f32.mrb[0].mxu0
      %v285 = vadd.f32 %v232, %v284
      %v286 = vpop.f32.mrb[0].mxu0
      %v287 = vpop.f32.mrb[0].mxu0
      %v288 = vpop.f32.mrb[0].mxu0
      %289 = vdwg.mxu0
      %v290 = vmax.f32 %v285, 0.0
      %v291 = vpack.c.bf16 %v290, %v290
      %v292 = vld [vmem:[%s3] sm:$0xf]
      %v293 = vld [vmem:[%s3 + $0x4] sm:$0xf]
      %v294 = vld [vmem:[%s3 + $0x8] sm:$0xf]
      %v295 = vld [vmem:[%s3 + $0xc] sm:$0xf]
      %v296 = vld [vmem:[%s3 + $0x10] sm:$0xf]
      %v297 = vld [vmem:[%s3 + $0x14] sm:$0xf]
      %v298 = vld [vmem:[%s3 + $0x18] sm:$0xf]
      %v299 = vld [vmem:[%s3 + $0x1c] sm:$0xf]
      %v300 = vld [vmem:[%s3 + $0x20] sm:$0xf]
      %v301 = vld [vmem:[%s3 + $0x24] sm:$0xf]
      %v302 = vld [vmem:[%s3 + $0x28] sm:$0xf]
      %v303 = vld [vmem:[%s3 + $0x2c] sm:$0xf]
      %v304 = vld [vmem:[%s3 + $0x30] sm:$0xf]
      %v305 = vld [vmem:[%s3 + $0x34] sm:$0xf]
      %v306 = vld [vmem:[%s3 + $0x38] sm:$0xf]
      %v307 = vld [vmem:[%s3 + $0x3c] sm:$0xf]
      %v308 = vld [vmem:[%s4] sm:$0x1]
      %v310 = vlaneseq
      %v311 = vshrl.u32 %v310, 7
      %v312 = vsub.s32 0, %v311
      %v313 = vrot.slane %v308, %v312
      %v331 = vunpack.c.l.b16 %v292
      %v332 = vunpack.c.l.b16 %v293
      %v333 = vunpack.c.l.b16 %v294
      %v334 = vunpack.c.l.b16 %v295
      %v335 = vunpack.c.l.b16 %v296
      %v336 = vunpack.c.l.b16 %v297
      %v337 = vunpack.c.l.b16 %v298
      %v338 = vunpack.c.l.b16 %v299
      %v339 = vunpack.c.l.b16 %v300
      %v340 = vunpack.c.l.b16 %v301
      %v341 = vunpack.c.l.b16 %v302
      %v342 = vunpack.c.l.b16 %v303
      %v343 = vunpack.c.l.b16 %v304
      %v344 = vunpack.c.l.b16 %v305
      %v345 = vunpack.c.l.b16 %v306
      %v346 = vunpack.c.l.b16 %v307
      %v347 = vpack.c.b16 %v332, %v331
      %v348 = vpack.c.b16 %v334, %v333
      %v349 = vpack.c.b16 %v336, %v335
      %v350 = vpack.c.b16 %v338, %v337
      %v351 = vpack.c.b16 %v340, %v339
      %v352 = vpack.c.b16 %v342, %v341
      %v353 = vpack.c.b16 %v344, %v343
      %v354 = vpack.c.b16 %v346, %v345
      %363 = vmatprep.subr.bf16.mxu0 0
      %364 = vmatpush1.bf16.msra.mxu0 %v347
      %365 = vmatprep.subr.bf16.mxu0 0
      %366 = vmatpush1.bf16.msra.mxu0 %v348
      %367 = vmatprep.subr.bf16.mxu0 0
      %368 = vmatpush1.bf16.msra.mxu0 %v349
      %369 = vmatprep.subr.bf16.mxu0 0
      %370 = vmatpush1.bf16.msra.mxu0 %v350
      %371 = vmatprep.subr.bf16.mxu0 0
      %372 = vmatpush1.bf16.msra.mxu0 %v351
      %373 = vmatprep.subr.bf16.mxu0 0
      %374 = vmatpush1.bf16.msra.mxu0 %v352
      %375 = vmatprep.subr.bf16.mxu0 0
      %376 = vmatpush1.bf16.msra.mxu0 %v353
      %377 = vmatprep.subr.bf16.mxu0 0
      %378 = vmatpush1.bf16.msra.mxu0 %v354
      %379 = vmatprep.subr.bf16.mxu0 0
      %380 = vmatpush1.bf16.msra.mxu0 0
      %381 = vmatprep.subr.bf16.mxu0 0
      %382 = vmatpush1.bf16.msra.mxu0 0
      %383 = vmatprep.subr.bf16.mxu0 0
      %384 = vmatpush1.bf16.msra.mxu0 0
      %385 = vmatprep.subr.bf16.mxu0 0
      %386 = vmatpush1.bf16.msra.mxu0 0
      %387 = vmatprep.subr.bf16.mxu0 0
      %388 = vmatpush1.bf16.msra.mxu0 0
      %389 = vmatprep.subr.bf16.mxu0 0
      %390 = vmatpush1.bf16.msra.mxu0 0
      %391 = vmatprep.subr.bf16.mxu0 0
      %392 = vmatpush1.bf16.msra.mxu0 0
      %393 = vmatprep.subr.bf16.mxu0 0
      %394 = vmatpush1.bf16.msra.mxu0 0
      %395 = vmatprep.mubr.bf16.mxu0 0
      %396 = vmatmul.mubr.bf16.gmra.mrb[0].mxu0 %v291
      %v397 = vpop.f32.mrb[0].mxu0
      %v398 = vadd.f32 %v313, %v397
      %v399 = vpop.f32.mrb[0].mxu0
      %v400 = vpop.f32.mrb[0].mxu0
      %v401 = vpop.f32.mrb[0].mxu0
      %402 = vdwg.mxu0
      %v403 = vsel %vm246, %v221, 0.0
      %v404 = vadd.f32 %v398, %v403
      %405 = vst [vmem:[%s219] sm:$0xff] %v404
      %p406 = scmp.lt.s32.totalorder %s16, 1
      %s407 = scalar_select %p406, %s16, 1
      %s408 = smul.addr %s407, 8
      %s409 = scalar_lea.vmem %s5, %s408
      // Predicated region
      $region41: #{pointwise_feed_forward.1} parent=39 // pred_check
        %p410 = pneg %p144
      $region42: #{pointwise_feed_forward.1} parent=39 // pred_check_branch
        %412 = sbr.rel (%p410) target = $region44
      $region43: #{pointwise_feed_forward.1} parent=39 // pred_region
        _
      $region44: #{pointwise_feed_forward.1} parent=39 // pred_fallthru
        _
    $region40: #{pointwise_feed_forward.1} parent=5 // pred_fallthru
      _
    %p413 = scmp.le.s32.totalorder 2, %s11
    // Predicated region
    $region45: #{pointwise_feed_forward.1} parent=5 // pred_check
      %p414 = pneg %p413
    $region46: #{pointwise_feed_forward.1} parent=5 // pred_check_branch
      %416 = sbr.rel (%p414) target = $region48
    $region47: #{pointwise_feed_forward.1} parent=5 // pred_region
      %s417 = ssub.s32 %s11, 2
      // Predicated region
      $region49: #{pointwise_feed_forward.1} parent=47 // pred_check
        %p418 = pneg %p150
      $region50: #{pointwise_feed_forward.1} parent=47 // pred_check_branch
        %420 = sbr.rel (%p418) target = $region52
      $region51: #{pointwise_feed_forward.1} parent=47 // pred_region
        %p421 = scmp.lt.s32.totalorder %s17, 1
        %s422 = scalar_select %p421, %s17, 1
        %s423 = smul.addr %s422, 8
        %s424 = scalar_lea.vmem %s5, %s423
      $region52: #{pointwise_feed_forward.1} parent=47 // pred_fallthru
        _
    $region48: #{pointwise_feed_forward.1} parent=5 // pred_fallthru
      _
  $region6: #{pointwise_feed_forward.1} parent=0 // loop_footer
    %s15 = sadd.s32 1, %s11
  $region7: #{pointwise_feed_forward.1} parent=0 // loop_footer_branch
    %10 = sbr.rel target = $region3
  $region8: #{pointwise_feed_forward.1} parent=0 // loop_exit
    _

</llo_original>
